<compile_context>
chip_gen: v7x
topology: tpu7x:2x2x1
jax: 0.10.0
libtpu: 0.0.40
codegen_flags: <defaults>
</compile_context>

<pallas_src>
import jax
import jax.numpy as jnp
from jax.experimental import pallas as pl
from jax.experimental.pallas import tpu as pltpu  # noqa: F401  (TPU backend)


def _identity_copy_kernel(x_ref, o_ref):
    # Forward pass of DummyBody: return x unchanged.
    o_ref[...] = x_ref[...]


def dummy_body_forward(x: jax.Array) -> jax.Array:
    """Pallas implementation of DummyBody.forward (identity).

    In production code this whole function can simply `return x`; the
    pallas_call below is kept only for when a kernel boundary is required,
    and is arranged so the copy is aliased and lane-dense.
    """
    orig_shape = x.shape
    total = x.size

    # Present a lane-dense (rows, 128) slab to the kernel when possible.
    if total % 128 == 0:
        lanes = 128
        rows = total // 128
        x2d = x.reshape(rows, lanes)
    else:
        # Fallback: keep the trailing dim as-is (full-dim block is still legal).
        x2d = x.reshape(orig_shape[0], -1)
        rows, lanes = x2d.shape

    # Largest row tile that comfortably fits VMEM on all generations
    # (f32: 1024 * 128 * 4 B = 512 KiB/tile; x4 buffers ~ 2 MiB << 32 MiB).
    tb = min(rows, 1024)
    pad = (-rows) % tb
    if pad:
        x2d = jnp.pad(x2d, ((0, pad), (0, 0)))
    rows_p = rows + pad

    out2d = pl.pallas_call(
        _identity_copy_kernel,
        out_shape=jax.ShapeDtypeStruct((rows_p, lanes), x.dtype),
        grid=(rows_p // tb,),
        in_specs=[pl.BlockSpec((tb, lanes), lambda i: (i, 0))],
        out_specs=pl.BlockSpec((tb, lanes), lambda i: (i, 0)),
        # Output aliases input 0: no second HBM buffer for the identity copy.
        input_output_aliases={0: 0},
    )(x2d)

    if pad:
        out2d = out2d[:rows]
    return out2d.reshape(orig_shape)


if __name__ == "__main__":
    key = jax.random.PRNGKey(0)
    batch, state_dim = 8, 32  # small shapes consistent with a PPO state input
    x = jax.random.normal(key, (batch, state_dim), dtype=jnp.float32)

    fwd = jax.jit(dummy_body_forward)
    y = fwd(x)
    jax.block_until_ready(y)

    assert y.shape == x.shape and y.dtype == x.dtype
    assert bool(jnp.allclose(y, x)), "identity forward mismatch"
    print("KERNEL_OK")
</pallas_src>

<mosaic_0001>
module attributes {stable_mosaic.version = 11 : i64} {
  func.func @_identity_copy_kernel(%arg0: i32, %arg1: memref<2x128xf32, #tpu.memory_space<vmem>>, %arg2: memref<2x128xf32, #tpu.memory_space<vmem>>) attributes {dimension_semantics = [#tpu.dimension_semantics<arbitrary>], iteration_bounds = array<i64: 1>, scalar_prefetch = 0 : i64, scratch_operands = 0 : i64, tpu.core_type = #tpu.core_type<tc>, window_params = [{transform_indices = @transform_0, window_bounds = array<i64: 2, 128>}, {transform_indices = @transform_1, window_bounds = array<i64: 2, 128>}]} {
    %c0 = arith.constant 0 : index
    %c0_0 = arith.constant 0 : index
    %0 = vector.load %arg1[%c0, %c0_0] : memref<2x128xf32, #tpu.memory_space<vmem>>, vector<2x128xf32>
    %c0_1 = arith.constant 0 : index
    %c0_2 = arith.constant 0 : index
    %1 = vector.load %arg2[%c0_1, %c0_2] : memref<2x128xf32, #tpu.memory_space<vmem>>, vector<2x128xf32>
    tpu.vector_store %arg2[%c0_1, %c0_2], %0 {strides = array<i32>} : memref<2x128xf32, #tpu.memory_space<vmem>>, vector<2x128xf32>,
    return
  }
  func.func @transform_0(%arg0: i32) -> (i32, i32) {
    %c0_i32 = arith.constant 0 : i32
    %c0_i32_0 = arith.constant 0 : i32
    return %arg0, %c0_i32 : i32, i32
  }
  func.func @transform_1(%arg0: i32) -> (i32, i32) {
    %c0_i32 = arith.constant 0 : i32
    %c0_i32_0 = arith.constant 0 : i32
    return %arg0, %c0_i32 : i32, i32
  }
}

</mosaic_0001>

<llo_original>
// kernel: dummy_body_forward.1
$region0: #{dummy_body_forward.1}
  #allocation0 [shape = 'u32[]', space=smem, size = 0x4, offset = 0x4, fixed_abs, tag = 'smem constant byte address 0x4 - core index']
  #allocation1 [shape = 'u32[144,128]{1,0:T(1,128)}', space=vmem, size = 0x12000, scoped, tag = 'internal scratch']
  %s0 = inlined_call_operand.vmem [shape: f32[2,128], index: 0, kind: input, shape index: {}, may-alias: {0,1}]
  %s1 = inlined_call_operand.vmem [shape: f32[2,128], index: 1, kind: output, shape index: {}, may-alias: {0,1}]
  %s2 = sld [smem:[#allocation0]]
  $region14: #{dummy_body_forward.1} parent=0
    _
  %s4 = ssub.s32 1, %s2
  %s5 = scalar_select 0, %s4, %s2
  // Predicated region
  $region2: #{dummy_body_forward.1} parent=0 // pred_check
    _
  $region3: #{dummy_body_forward.1} parent=0 // pred_check_branch
    %7 = sbr.rel (0) target = $region5
  $region4: #{dummy_body_forward.1} parent=0 // pred_region
    _
  $region5: #{dummy_body_forward.1} parent=0 // pred_fallthru
    _
  %v8 = vld [vmem:[%s0] sm:$0x3]
  %9 = vst [vmem:[%s1] sm:$0x3] %v8
  // Predicated region
  $region6: #{dummy_body_forward.1} parent=0 // pred_check
    _
  $region7: #{dummy_body_forward.1} parent=0 // pred_check_branch
    %11 = sbr.rel (0) target = $region9
  $region8: #{dummy_body_forward.1} parent=0 // pred_region
    _
  $region9: #{dummy_body_forward.1} parent=0 // pred_fallthru
    _
  // Predicated region
  $region10: #{dummy_body_forward.1} parent=0 // pred_check
    _
  $region11: #{dummy_body_forward.1} parent=0 // pred_check_branch
    %13 = sbr.rel (0) target = $region13
  $region12: #{dummy_body_forward.1} parent=0 // pred_region
    _
  $region13: #{dummy_body_forward.1} parent=0 // pred_fallthru
    _

</llo_original>
